<compile_context>
chip_gen: v7x
topology: tpu7x:2x2x1
jax: 0.10.0
libtpu: 0.0.40
codegen_flags: <defaults>
</compile_context>

<pallas_src>
import jax
import jax.numpy as jnp
from jax.experimental import pallas as pl
from jax.experimental.pallas import tpu as pltpu

BN_EPS = 1e-5
MAX_TILE_M = 2048        # upper bound on the batch tile (VMEM is a non-issue here)
SINGLE_BLOCK_MAX = 256   # at or below this, a single block; grid gives no benefit


def _make_value_net_kernel(layer_specs, act_dtype):
    """Build the fused forward kernel.

    Ref order: x, (W_i, b_i) per layer, wo_row, bo, out.
      W_i   : [in_i, out_i(_cat)]   -- eval-mode BN pre-folded; for a 'linear'
              skip layer this is [W_main | W_skip] concatenated along N.
      b_i   : [1, out_i(_cat)] f32
      wo_row: [1, K] head weight row (duplicated [wo|wo] when the last hidden
              layer has a 'linear' skip -- see prepare_value_network).
      bo    : [1, 1] f32
      out   : [1, 1, tile_m] f32 lane-dense row of value estimates.
    """
    n_layers = len(layer_specs)

    def kernel(*refs):
        it = iter(refs)
        # Activations live in the matmul compute dtype between layers.
        x = next(it)[...].astype(act_dtype)

        for li, (kind, h) in enumerate(layer_specs):
            W = next(it)[...]
            b = next(it)[...]
            # BN is pre-folded: one MXU matmul + f32 bias per layer.
            z = jnp.dot(x, W, preferred_element_type=jnp.float32) + b
            if li == n_layers - 1 and kind == "linear":
                # Last hidden layer with a Linear skip: keep [main|skip] halves
                # un-summed; lane-mask the ReLU onto the main half only.  The
                # duplicated head row reduces both halves in one MXU pass.
                lane = jax.lax.broadcasted_iota(jnp.int32, z.shape, 1)
                x = jnp.where(lane < h, jnp.maximum(z, 0.0), z).astype(act_dtype)
            elif kind == "linear":
                # relu(main half) + skip half, both from the same MXU pass.
                x = (jnp.maximum(z[:, :h], 0.0) + z[:, h:]).astype(act_dtype)
            elif kind == "identity":
                x = jnp.maximum(z, 0.0).astype(act_dtype) + x
            else:  # first layer: no residual; Dropout is identity in eval mode.
                x = jnp.maximum(z, 0.0).astype(act_dtype)

        wo = next(it)[...]
        bo = next(it)[...]
        out_ref = next(it)
        # Head directly in lane-dense orientation: contract K on both operands
        # ("NT" matmul, rhs transposed) -> (1, tile_m).  MXU has ample slack.
        head = jax.lax.dot_general(
            wo, x, (((1,), (1,)), ((), ())),
            preferred_element_type=jnp.float32)
        out_ref[...] = (head + bo).reshape(out_ref.shape)

    return kernel


def prepare_value_network(params, skip_kinds, compute_dtype=jnp.bfloat16):
    """Fold eval-mode BN into the Linear weights/biases and pack kernel operands.

    Done ONCE at init time.  Returns (flat_weights, layer_specs):
      flat_weights: tuple of arrays consumed by the kernel after x
      layer_specs : static tuple of (skip_kind, hidden_dim) per layer
    On v5e prefer compute_dtype=jnp.float32 (no native bf16 VPU/EUP).
    """
    ibn = params["input_bn"]
    a_in = ibn["gamma"] * jax.lax.rsqrt(ibn["var"] + BN_EPS)   # [1, D]
    c_in = ibn["beta"] - ibn["mean"] * a_in                    # [1, D]

    flat = []
    layer_specs = []
    for i, layer in enumerate(params["layers"]):
        W, b = layer["W"], layer["b"]
        # Fold the post-Linear BN:  ((xW+b) - m)*s + beta  ==  x(W*s) + (b-m)*s + beta
        s = layer["bn_gamma"] * jax.lax.rsqrt(layer["bn_var"] + BN_EPS)   # [1, h]
        Wf = W * s
        bf = (b - layer["bn_mean"]) * s + layer["bn_beta"]
        if i == 0:
            # Fold the input BN (affine x*a + c) into the first Linear.
            bf = c_in @ Wf + bf
            Wf = a_in.T * Wf
        kind = skip_kinds[i]
        if kind == "linear":
            # Merge the main and skip matmuls into one lane-filling MXU pass.
            Wf = jnp.concatenate([Wf, layer["skip_W"]], axis=1)
            bf = jnp.concatenate([bf, layer["skip_b"]], axis=1)
        flat += [Wf.astype(compute_dtype), bf.astype(jnp.float32)]
        layer_specs.append((kind, layer["W"].shape[1]))

    woT = params["output"]["W"].T                              # [1, prev]
    if layer_specs[-1][0] == "linear":
        # The last hidden layer's main/skip halves are never summed in-kernel;
        # duplicating the head row lets one contraction cover both halves.
        woT = jnp.concatenate([woT, woT], axis=1)
    flat += [woT.astype(compute_dtype),
             params["output"]["b"].astype(jnp.float32)]
    return tuple(flat), tuple(layer_specs)


def _pick_batch_tile(batch, max_tile=MAX_TILE_M):
    """Largest lane-aligned batch tile that still leaves >= 2 grid steps."""
    if batch <= SINGLE_BLOCK_MAX:
        return batch
    half = pl.cdiv(batch, 2)
    return min(max_tile, ((half + 127) // 128) * 128)


def value_network_forward(x, flat_weights, layer_specs, *, max_tile=MAX_TILE_M):
    """Invoke the fused kernel with a 1-D (parallel) grid over the batch.

    No wrapper-side padding copy of x: the ragged last block is masked by
    Pallas; its garbage rows are computed row-wise and dropped by [:batch].
    """
    if x.ndim == 1:
        x = x[None, :]
    batch, d = x.shape
    tm = _pick_batch_tile(batch, max_tile)
    grid_m = pl.cdiv(batch, tm)

    act_dtype = flat_weights[0].dtype
    kernel = _make_value_net_kernel(layer_specs, act_dtype)

    in_specs = [pl.BlockSpec((tm, d), lambda i: (i, 0))]
    # Weights/biases are grid-invariant: same block every step -> stay resident.
    in_specs += [pl.BlockSpec(w.shape, lambda i: (0, 0)) for w in flat_weights]
    # Lane-dense output rows: one [1, 1, tm] slab per grid step.
    out_specs = pl.BlockSpec((1, 1, tm), lambda i: (i, 0, 0))

    out = pl.pallas_call(
        kernel,
        out_shape=jax.ShapeDtypeStruct((grid_m, 1, tm), jnp.float32),
        grid=(grid_m,),
        in_specs=in_specs,
        out_specs=out_specs,
        compiler_params=pltpu.CompilerParams(
            dimension_semantics=("parallel",)),
    )(x, *flat_weights)

    out = out.reshape(grid_m * tm, 1)[:batch]
    if out.shape[0] == 1:
        out = out[0]
    return out


# ----------------------------------------------------------------------------
# Parameter construction + plain-JAX references (for correctness checking)
# ----------------------------------------------------------------------------
def init_value_network_params(key, input_dim, hidden_dims):
    """Deterministic synthetic parameters matching the PyTorch module's shapes."""
    params = {}
    keys = jax.random.split(key, 4 + 8 * len(hidden_dims) + 2)
    kidx = 0

    def nxt():
        nonlocal kidx
        k = keys[kidx]
        kidx += 1
        return k

    params["input_bn"] = dict(
        gamma=1.0 + 0.1 * jax.random.normal(nxt(), (1, input_dim), jnp.float32),
        beta=0.1 * jax.random.normal(nxt(), (1, input_dim), jnp.float32),
        mean=0.1 * jax.random.normal(nxt(), (1, input_dim), jnp.float32),
        var=jnp.abs(1.0 + 0.1 * jax.random.normal(nxt(), (1, input_dim), jnp.float32)),
    )

    layers = []
    skip_kinds = []
    prev = input_dim
    for i, h in enumerate(hidden_dims):
        layer = dict(
            W=0.1 * jax.random.normal(nxt(), (prev, h), jnp.float32),
            b=0.1 * jax.random.normal(nxt(), (1, h), jnp.float32),
            bn_gamma=1.0 + 0.1 * jax.random.normal(nxt(), (1, h), jnp.float32),
            bn_beta=0.1 * jax.random.normal(nxt(), (1, h), jnp.float32),
            bn_mean=0.1 * jax.random.normal(nxt(), (1, h), jnp.float32),
            bn_var=jnp.abs(1.0 + 0.1 * jax.random.normal(nxt(), (1, h), jnp.float32)),
        )
        if i > 0 and prev == h:
            skip_kinds.append("identity")
        elif i > 0:
            skip_kinds.append("linear")
            k1, k2 = jax.random.split(nxt())
            layer["skip_W"] = 0.1 * jax.random.normal(k1, (prev, h), jnp.float32)
            layer["skip_b"] = 0.1 * jax.random.normal(k2, (1, h), jnp.float32)
        else:
            skip_kinds.append("none")
        layers.append(layer)
        prev = h

    params["layers"] = layers
    ko1, ko2 = jax.random.split(nxt())
    params["output"] = dict(
        W=0.1 * jax.random.normal(ko1, (prev, 1), jnp.float32),
        b=0.1 * jax.random.normal(ko2, (1, 1), jnp.float32),
    )
    return params, tuple(skip_kinds)


def value_network_reference(x, params, skip_kinds):
    """Unfused plain-JAX reference (eval-mode BN with running stats)."""
    if x.ndim == 1:
        x = x[None, :]
    ibn = params["input_bn"]
    x = (x - ibn["mean"]) * jax.lax.rsqrt(ibn["var"] + BN_EPS) * ibn["gamma"] + ibn["beta"]
    for i, layer in enumerate(params["layers"]):
        h = x @ layer["W"] + layer["b"]
        h = (h - layer["bn_mean"]) * jax.lax.rsqrt(layer["bn_var"] + BN_EPS) \
            * layer["bn_gamma"] + layer["bn_beta"]
        h = jnp.maximum(h, 0.0)
        if skip_kinds[i] == "identity":
            h = h + x
        elif skip_kinds[i] == "linear":
            h = h + x @ layer["skip_W"] + layer["skip_b"]
        x = h
    out = x @ params["output"]["W"] + params["output"]["b"]
    if out.shape[0] == 1:
        out = out[0]
    return out


def value_network_reference_folded(x, flat_weights, layer_specs):
    """Plain-JAX mirror of the fused kernel math (same folded/casted weights)."""
    if x.ndim == 1:
        x = x[None, :]
    act_dtype = flat_weights[0].dtype
    x = x.astype(act_dtype)
    n_layers = len(layer_specs)
    idx = 0
    for li, (kind, h) in enumerate(layer_specs):
        W = flat_weights[idx]
        b = flat_weights[idx + 1]
        idx += 2
        z = jnp.dot(x, W, preferred_element_type=jnp.float32) + b
        if li == n_layers - 1 and kind == "linear":
            lane = jax.lax.broadcasted_iota(jnp.int32, z.shape, 1)
            x = jnp.where(lane < h, jnp.maximum(z, 0.0), z).astype(act_dtype)
        elif kind == "linear":
            x = (jnp.maximum(z[:, :h], 0.0) + z[:, h:]).astype(act_dtype)
        elif kind == "identity":
            x = jnp.maximum(z, 0.0).astype(act_dtype) + x
        else:
            x = jnp.maximum(z, 0.0).astype(act_dtype)
    wo = flat_weights[idx]
    bo = flat_weights[idx + 1]
    head = jax.lax.dot_general(wo, x, (((1,), (1,)), ((), ())),
                               preferred_element_type=jnp.float32)   # (1, batch)
    out = head.reshape(-1, 1) + bo
    if out.shape[0] == 1:
        out = out[0]
    return out


if __name__ == "__main__":
    key = jax.random.PRNGKey(0)
    kx, kp, kx2 = jax.random.split(key, 3)

    input_dim = 16
    hidden_dims = [32, 32, 64]   # exercises both Identity and Linear skips
    batch = 4

    x = jax.random.normal(kx, (batch, input_dim), jnp.float32)
    params, skip_kinds = init_value_network_params(kp, input_dim, hidden_dims)

    ref = value_network_reference(x, params, skip_kinds)

    # 1) f32 path: BN folding is exact up to f32 rounding -> tight tolerance
    #    against the unfused reference.
    flat32, specs32 = prepare_value_network(params, skip_kinds,
                                            compute_dtype=jnp.float32)
    out32 = jax.block_until_ready(value_network_forward(x, flat32, specs32))
    assert out32.shape == (batch, 1), out32.shape
    assert jnp.allclose(out32, ref, atol=1e-4, rtol=1e-4), (out32, ref)

    # 2) bf16 matmul/activation path (recommended for v6e/v7x): compare against
    #    a plain-JAX reference that uses the same folded bf16 weights.
    flat16, specs16 = prepare_value_network(params, skip_kinds,
                                            compute_dtype=jnp.bfloat16)
    out16 = jax.block_until_ready(value_network_forward(x, flat16, specs16))
    ref16 = value_network_reference_folded(x, flat16, specs16)
    assert out16.shape == (batch, 1), out16.shape
    assert jnp.allclose(out16, ref16, atol=1e-3, rtol=1e-3), (out16, ref16)

    # 3) Larger batch: exercises the >=2-step "parallel" grid, the ragged
    #    (unpadded) last block, and the lane-dense output path.
    big_batch = 300
    xb = jax.random.normal(kx2, (big_batch, input_dim), jnp.float32)
    outb = jax.block_until_ready(value_network_forward(xb, flat16, specs16))
    refb = value_network_reference_folded(xb, flat16, specs16)
    assert outb.shape == (big_batch, 1), outb.shape
    assert jnp.allclose(outb, refb, atol=1e-3, rtol=1e-3)

    print("KERNEL_OK")
</pallas_src>

<mosaic_0001>
module attributes {stable_mosaic.version = 11 : i64} {
  func.func @kernel(%arg0: i32, %arg1: memref<4x16xf32, #tpu.memory_space<vmem>>, %arg2: memref<16x32xf32, #tpu.memory_space<vmem>>, %arg3: memref<1x32xf32, #tpu.memory_space<vmem>>, %arg4: memref<32x32xf32, #tpu.memory_space<vmem>>, %arg5: memref<1x32xf32, #tpu.memory_space<vmem>>, %arg6: memref<32x128xf32, #tpu.memory_space<vmem>>, %arg7: memref<1x128xf32, #tpu.memory_space<vmem>>, %arg8: memref<1x128xf32, #tpu.memory_space<vmem>>, %arg9: memref<1x1xf32, #tpu.memory_space<vmem>>, %arg10: memref<1x1x4xf32, #tpu.memory_space<vmem>>) attributes {dimension_semantics = [#tpu.dimension_semantics<parallel>], iteration_bounds = array<i64: 1>, scalar_prefetch = 0 : i64, scratch_operands = 0 : i64, tpu.core_type = #tpu.core_type<tc>, window_params = [{transform_indices = @transform_0, window_bounds = array<i64: 4, 16>}, {pipeline_mode = #tpu.pipeline_mode<synchronous>, transform_indices = @transform_1, window_bounds = array<i64: 16, 32>}, {pipeline_mode = #tpu.pipeline_mode<synchronous>, transform_indices = @transform_2, window_bounds = array<i64: 1, 32>}, {pipeline_mode = #tpu.pipeline_mode<synchronous>, transform_indices = @transform_3, window_bounds = array<i64: 32, 32>}, {pipeline_mode = #tpu.pipeline_mode<synchronous>, transform_indices = @transform_4, window_bounds = array<i64: 1, 32>}, {pipeline_mode = #tpu.pipeline_mode<synchronous>, transform_indices = @transform_5, window_bounds = array<i64: 32, 128>}, {pipeline_mode = #tpu.pipeline_mode<synchronous>, transform_indices = @transform_6, window_bounds = array<i64: 1, 128>}, {pipeline_mode = #tpu.pipeline_mode<synchronous>, transform_indices = @transform_7, window_bounds = array<i64: 1, 128>}, {pipeline_mode = #tpu.pipeline_mode<synchronous>, transform_indices = @transform_8, window_bounds = array<i64: 1, 1>}, {transform_indices = @transform_9, window_bounds = array<i64: 1, 1, 4>}]} {
    %c0 = arith.constant 0 : index
    %c0_0 = arith.constant 0 : index
    %0 = vector.load %arg1[%c0, %c0_0] : memref<4x16xf32, #tpu.memory_space<vmem>>, vector<4x16xf32>
    %c0_1 = arith.constant 0 : index
    %c0_2 = arith.constant 0 : index
    %1 = vector.load %arg2[%c0_1, %c0_2] : memref<16x32xf32, #tpu.memory_space<vmem>>, vector<16x32xf32>
    %c0_3 = arith.constant 0 : index
    %c0_4 = arith.constant 0 : index
    %2 = vector.load %arg3[%c0_3, %c0_4] : memref<1x32xf32, #tpu.memory_space<vmem>>, vector<1x32xf32>
    %cst = arith.constant dense<0.000000e+00> : vector<4x32xf32>
    %3 = tpu.matmul %0, %1, %cst {dimension_numbers = #tpu.dot_dimension_numbers<[1], [0], [0], [1], [0, 0, 1, 1], [], []>} : vector<4x16xf32>, vector<16x32xf32>, vector<4x32xf32> -> vector<4x32xf32>
    %4 = vector.broadcast %2 : vector<1x32xf32> to vector<4x32xf32>
    %5 = arith.addf %3, %4 : vector<4x32xf32>
    %cst_5 = arith.constant 0.000000e+00 : f32
    %6 = vector.broadcast %cst_5 : f32 to vector<4x32xf32>
    %7 = arith.maximumf %5, %6 : vector<4x32xf32>
    %c0_6 = arith.constant 0 : index
    %c0_7 = arith.constant 0 : index
    %8 = vector.load %arg4[%c0_6, %c0_7] : memref<32x32xf32, #tpu.memory_space<vmem>>, vector<32x32xf32>
    %c0_8 = arith.constant 0 : index
    %c0_9 = arith.constant 0 : index
    %9 = vector.load %arg5[%c0_8, %c0_9] : memref<1x32xf32, #tpu.memory_space<vmem>>, vector<1x32xf32>
    %cst_10 = arith.constant dense<0.000000e+00> : vector<4x32xf32>
    %10 = tpu.matmul %7, %8, %cst_10 {dimension_numbers = #tpu.dot_dimension_numbers<[1], [0], [0], [1], [0, 0, 1, 1], [], []>} : vector<4x32xf32>, vector<32x32xf32>, vector<4x32xf32> -> vector<4x32xf32>
    %11 = vector.broadcast %9 : vector<1x32xf32> to vector<4x32xf32>
    %12 = arith.addf %10, %11 : vector<4x32xf32>
    %cst_11 = arith.constant 0.000000e+00 : f32
    %13 = vector.broadcast %cst_11 : f32 to vector<4x32xf32>
    %14 = arith.maximumf %12, %13 : vector<4x32xf32>
    %15 = arith.addf %14, %7 : vector<4x32xf32>
    %c0_12 = arith.constant 0 : index
    %c0_13 = arith.constant 0 : index
    %16 = vector.load %arg6[%c0_12, %c0_13] : memref<32x128xf32, #tpu.memory_space<vmem>>, vector<32x128xf32>
    %c0_14 = arith.constant 0 : index
    %c0_15 = arith.constant 0 : index
    %17 = vector.load %arg7[%c0_14, %c0_15] : memref<1x128xf32, #tpu.memory_space<vmem>>, vector<1x128xf32>
    %cst_16 = arith.constant dense<0.000000e+00> : vector<4x128xf32>
    %18 = tpu.matmul %15, %16, %cst_16 {dimension_numbers = #tpu.dot_dimension_numbers<[1], [0], [0], [1], [0, 0, 1, 1], [], []>} : vector<4x32xf32>, vector<32x128xf32>, vector<4x128xf32> -> vector<4x128xf32>
    %19 = vector.broadcast %17 : vector<1x128xf32> to vector<4x128xf32>
    %20 = arith.addf %18, %19 : vector<4x128xf32>
    %21 = tpu.iota {dimensions = array<i32: 1>} : vector<4x128xi32>
    %c64_i32 = arith.constant 64 : i32
    %22 = vector.broadcast %c64_i32 : i32 to vector<4x128xi32>
    %23 = arith.cmpi slt, %21, %22 : vector<4x128xi32>
    %cst_17 = arith.constant 0.000000e+00 : f32
    %24 = vector.broadcast %cst_17 : f32 to vector<4x128xf32>
    %25 = arith.maximumf %20, %24 : vector<4x128xf32>
    %26 = arith.select %23, %25, %20 : vector<4x128xi1>, vector<4x128xf32>
    %c0_18 = arith.constant 0 : index
    %c0_19 = arith.constant 0 : index
    %27 = vector.load %arg8[%c0_18, %c0_19] : memref<1x128xf32, #tpu.memory_space<vmem>>, vector<1x128xf32>
    %c0_20 = arith.constant 0 : index
    %c0_21 = arith.constant 0 : index
    %28 = vector.load %arg9[%c0_20, %c0_21] : memref<1x1xf32, #tpu.memory_space<vmem>>, vector<1x1xf32>
    %cst_22 = arith.constant dense<0.000000e+00> : vector<1x4xf32>
    %29 = tpu.matmul %27, %26, %cst_22 {dimension_numbers = #tpu.dot_dimension_numbers<[1], [1], [0], [0], [0, 0, 1, 0], [], []>} : vector<1x128xf32>, vector<4x128xf32>, vector<1x4xf32> -> vector<1x4xf32>
    %30 = vector.broadcast %28 : vector<1x1xf32> to vector<1x4xf32>
    %31 = arith.addf %29, %30 : vector<1x4xf32>
    %32 = vector.shape_cast %31 : vector<1x4xf32> to vector<1x1x4xf32>
    %c0_23 = arith.constant 0 : index
    %c0_24 = arith.constant 0 : index
    %c0_25 = arith.constant 0 : index
    %33 = vector.load %arg10[%c0_23, %c0_24, %c0_25] : memref<1x1x4xf32, #tpu.memory_space<vmem>>, vector<1x1x4xf32>
    tpu.vector_store %arg10[%c0_23, %c0_24, %c0_25], %32 {strides = array<i32>} : memref<1x1x4xf32, #tpu.memory_space<vmem>>, vector<1x1x4xf32>,
    return
  }
  func.func @transform_0(%arg0: i32) -> (i32, i32) {
    %c0_i32 = arith.constant 0 : i32
    %c0_i32_0 = arith.constant 0 : i32
    return %arg0, %c0_i32 : i32, i32
  }
  func.func @transform_1(%arg0: i32) -> (i32, i32) {
    %c0_i32 = arith.constant 0 : i32
    %c0_i32_0 = arith.constant 0 : i32
    %c0_i32_1 = arith.constant 0 : i32
    return %c0_i32, %c0_i32_0 : i32, i32
  }
  func.func @transform_2(%arg0: i32) -> (i32, i32) {
    %c0_i32 = arith.constant 0 : i32
    %c0_i32_0 = arith.constant 0 : i32
    %c0_i32_1 = arith.constant 0 : i32
    return %c0_i32, %c0_i32_0 : i32, i32
  }
  func.func @transform_3(%arg0: i32) -> (i32, i32) {
    %c0_i32 = arith.constant 0 : i32
    %c0_i32_0 = arith.constant 0 : i32
    %c0_i32_1 = arith.constant 0 : i32
    return %c0_i32, %c0_i32_0 : i32, i32
  }
  func.func @transform_4(%arg0: i32) -> (i32, i32) {
    %c0_i32 = arith.constant 0 : i32
    %c0_i32_0 = arith.constant 0 : i32
    %c0_i32_1 = arith.constant 0 : i32
    return %c0_i32, %c0_i32_0 : i32, i32
  }
  func.func @transform_5(%arg0: i32) -> (i32, i32) {
    %c0_i32 = arith.constant 0 : i32
    %c0_i32_0 = arith.constant 0 : i32
    %c0_i32_1 = arith.constant 0 : i32
    return %c0_i32, %c0_i32_0 : i32, i32
  }
  func.func @transform_6(%arg0: i32) -> (i32, i32) {
    %c0_i32 = arith.constant 0 : i32
    %c0_i32_0 = arith.constant 0 : i32
    %c0_i32_1 = arith.constant 0 : i32
    return %c0_i32, %c0_i32_0 : i32, i32
  }
  func.func @transform_7(%arg0: i32) -> (i32, i32) {
    %c0_i32 = arith.constant 0 : i32
    %c0_i32_0 = arith.constant 0 : i32
    %c0_i32_1 = arith.constant 0 : i32
    return %c0_i32, %c0_i32_0 : i32, i32
  }
  func.func @transform_8(%arg0: i32) -> (i32, i32) {
    %c0_i32 = arith.constant 0 : i32
    %c0_i32_0 = arith.constant 0 : i32
    %c0_i32_1 = arith.constant 0 : i32
    return %c0_i32, %c0_i32_0 : i32, i32
  }
  func.func @transform_9(%arg0: i32) -> (i32, i32, i32) {
    %c0_i32 = arith.constant 0 : i32
    %c0_i32_0 = arith.constant 0 : i32
    %c0_i32_1 = arith.constant 0 : i32
    return %arg0, %c0_i32, %c0_i32_0 : i32, i32, i32
  }
}

</mosaic_0001>

<llo_original>
// kernel: tpu_custom_call.1
$region0: #{tpu_custom_call.1}
  #allocation0 [shape = 'u32[]', space=smem, size = 0x4, offset = 0x4, fixed_abs, tag = 'smem constant byte address 0x4 - core index']
  #allocation1 [shape = 'u32[144,128]{1,0:T(1,128)}', space=vmem, size = 0x12000, scoped, tag = 'internal scratch']
  #allocation2 [shape = 'f32[1,1]{1,0:T(1,128)S(1)}', space=vmem, size = 0x200, scoped, tag = 'scoped memory for tpu_custom_call.1']
  %s0 = inlined_call_operand.hbm [shape: f32[4,16], index: 0, kind: input, shape index: {}]
  %s1 = inlined_call_operand.hbm [shape: f32[16,32], index: 1, kind: input, shape index: {}]
  %s2 = inlined_call_operand.vmem [shape: f32[1,32], index: 2, kind: input, shape index: {}]
  %s3 = inlined_call_operand.hbm [shape: f32[32,32], index: 3, kind: input, shape index: {}]
  %s4 = inlined_call_operand.vmem [shape: f32[1,32], index: 4, kind: input, shape index: {}]
  %s5 = inlined_call_operand.hbm [shape: f32[32,128], index: 5, kind: input, shape index: {}]
  %s6 = inlined_call_operand.vmem [shape: f32[1,128], index: 6, kind: input, shape index: {}]
  %s7 = inlined_call_operand.vmem [shape: f32[1,128], index: 7, kind: input, shape index: {}]
  %s8 = inlined_call_operand.<no memory space> [shape: f32[1,1], index: 8, kind: input, shape index: {}]
  %s9 = inlined_call_operand.hbm [shape: f32[1,1,4], index: 9, kind: output, shape index: {}]
  %s10 = sld [smem:[#allocation0]]
  $region62: #{tpu_custom_call.1} parent=0
    _
  %s12 = ssub.s32 1, %s10
  %s13 = scalar_select 0, %s12, %s10
  %v14 = vstv %s8
  %15 = vst [vmem:[#allocation2] sm:$0x1] %v14
  $region1: #{tpu_custom_call.1} parent=0
    #allocation3 [shape = 'u8[2048]{0}', space=vmem, size = 0x800, scoped, tag = 'input window, operand 0, single buffered']
    #allocation4 [shape = 's32[1]{0}', space=sflag, size = 0x4, scoped, tag = 'scoped memory for tpu_custom_call.1']
    #allocation5 [shape = 's32[1]{0}', space=sflag, size = 0x4, scoped, tag = 'scoped memory for tpu_custom_call.1']
    #allocation6 [shape = 'u8[8192]{0}', space=vmem, size = 0x2000, scoped, tag = 'input window, operand 1, single buffered']
    #allocation7 [shape = 's32[1]{0}', space=sflag, size = 0x4, scoped, tag = 'scoped memory for tpu_custom_call.1']
    #allocation8 [shape = 'u8[16384]{0}', space=vmem, size = 0x4000, scoped, tag = 'input window, operand 3, single buffered']
    #allocation9 [shape = 'u8[16384]{0}', space=vmem, size = 0x4000, scoped, tag = 'input window, operand 5, single buffered']
    #allocation10 [shape = 's32[1]{0}', space=sflag, size = 0x4, scoped, tag = 'scoped memory for tpu_custom_call.1']
    #allocation11 [shape = 'u8[512]{0}', space=vmem, size = 0x400, scoped, tag = 'output window, operand 0, single buffered']
    %16 = vsyncpa [#allocation4], 0
    %17 = vsyncpa [#allocation7], 0
    %18 = vsyncpa [#allocation10], 0
    %19 = vsyncpa [#allocation5], 0
    // Predicated region
    $region2: #{tpu_custom_call.1} parent=1 // pred_check
      _
    $region3: #{tpu_custom_call.1} parent=1 // pred_check_branch
      %21 = sbr.rel (0) target = $region5
    $region4: #{tpu_custom_call.1} parent=1 // pred_region
      %s23 = ssub.s32 64, 64
      %24 = vsyncadd [#allocation4], %s23
      %s26 = sshll.u32 [#allocation3], 4
      %s27 = int_to_ptr.vmem [resolvable:$true] %s26
      %29 = dma.hbm_to_vmem [thread:$0]  %s0, 64, %s27, [#allocation4]
    $region5: #{tpu_custom_call.1} parent=1 // pred_fallthru
      _
    // Predicated region
    $region6: #{tpu_custom_call.1} parent=1 // pred_check
      _
    $region7: #{tpu_custom_call.1} parent=1 // pred_check_branch
      %31 = sbr.rel (0) target = $region9
    $region8: #{tpu_custom_call.1} parent=1 // pred_region
      %s33 = ssub.s32 256, 256
      %34 = vsyncadd [#allocation7], %s33
      %s35 = sshll.u32 [#allocation6], 4
      %s36 = int_to_ptr.vmem [resolvable:$true] %s35
      %41 = dma.hbm_to_vmem [thread:$0]  %s1, 256, %s36, [#allocation7], 128, 128, 8
    $region9: #{tpu_custom_call.1} parent=1 // pred_fallthru
      _
    // Predicated region
    $region10: #{tpu_custom_call.1} parent=1 // pred_check
      _
    $region11: #{tpu_custom_call.1} parent=1 // pred_check_branch
      %43 = sbr.rel (0) target = $region13
    $region12: #{tpu_custom_call.1} parent=1 // pred_region
      _
    $region13: #{tpu_custom_call.1} parent=1 // pred_fallthru
      _
    // Predicated region
    $region14: #{tpu_custom_call.1} parent=1 // pred_check
      _
    $region15: #{tpu_custom_call.1} parent=1 // pred_check_branch
      %45 = sbr.rel (0) target = $region17
    $region16: #{tpu_custom_call.1} parent=1 // pred_region
      %s47 = ssub.s32 512, 512
      %48 = vsyncadd [#allocation7], %s47
      %s49 = sshll.u32 [#allocation8], 4
      %s50 = int_to_ptr.vmem [resolvable:$true] %s49
      %55 = dma.hbm_to_vmem [thread:$0]  %s3, 512, %s50, [#allocation7], 128, 128, 8
    $region17: #{tpu_custom_call.1} parent=1 // pred_fallthru
      _
    // Predicated region
    $region18: #{tpu_custom_call.1} parent=1 // pred_check
      _
    $region19: #{tpu_custom_call.1} parent=1 // pred_check_branch
      %57 = sbr.rel (0) target = $region21
    $region20: #{tpu_custom_call.1} parent=1 // pred_region
      _
    $region21: #{tpu_custom_call.1} parent=1 // pred_fallthru
      _
    // Predicated region
    $region22: #{tpu_custom_call.1} parent=1 // pred_check
      _
    $region23: #{tpu_custom_call.1} parent=1 // pred_check_branch
      %59 = sbr.rel (0) target = $region25
    $region24: #{tpu_custom_call.1} parent=1 // pred_region
      %s61 = ssub.s32 512, 512
      %62 = vsyncadd [#allocation10], %s61
      %s63 = sshll.u32 [#allocation9], 4
      %s64 = int_to_ptr.vmem [resolvable:$true] %s63
      %69 = dma.hbm_to_vmem [thread:$0]  %s5, 512, %s64, [#allocation10], 128, 128, 8
    $region25: #{tpu_custom_call.1} parent=1 // pred_fallthru
      _
    // Predicated region
    $region26: #{tpu_custom_call.1} parent=1 // pred_check
      _
    $region27: #{tpu_custom_call.1} parent=1 // pred_check_branch
      %71 = sbr.rel (0) target = $region29
    $region28: #{tpu_custom_call.1} parent=1 // pred_region
      _
    $region29: #{tpu_custom_call.1} parent=1 // pred_fallthru
      _
    // Predicated region
    $region30: #{tpu_custom_call.1} parent=1 // pred_check
      _
    $region31: #{tpu_custom_call.1} parent=1 // pred_check_branch
      %73 = sbr.rel (0) target = $region33
    $region32: #{tpu_custom_call.1} parent=1 // pred_region
      _
    $region33: #{tpu_custom_call.1} parent=1 // pred_fallthru
      _
    // Predicated region
    $region34: #{tpu_custom_call.1} parent=1 // pred_check
      _
    $region35: #{tpu_custom_call.1} parent=1 // pred_check_branch
      %75 = sbr.rel (0) target = $region37
    $region36: #{tpu_custom_call.1} parent=1 // pred_region
      _
    $region37: #{tpu_custom_call.1} parent=1 // pred_fallthru
      _
    // Predicated region
    $region38: #{tpu_custom_call.1} parent=1 // pred_check
      _
    $region39: #{tpu_custom_call.1} parent=1 // pred_check_branch
      %77 = sbr.rel (0) target = $region41
    $region40: #{tpu_custom_call.1} parent=1 // pred_region
      %78 = dma.done [#allocation4], 64
    $region41: #{tpu_custom_call.1} parent=1 // pred_fallthru
      _
    // Predicated region
    $region42: #{tpu_custom_call.1} parent=1 // pred_check
      _
    $region43: #{tpu_custom_call.1} parent=1 // pred_check_branch
      %80 = sbr.rel (0) target = $region45
    $region44: #{tpu_custom_call.1} parent=1 // pred_region
      %81 = dma.done [#allocation7], 256
    $region45: #{tpu_custom_call.1} parent=1 // pred_fallthru
      _
    // Predicated region
    $region46: #{tpu_custom_call.1} parent=1 // pred_check
      _
    $region47: #{tpu_custom_call.1} parent=1 // pred_check_branch
      %83 = sbr.rel (0) target = $region49
    $region48: #{tpu_custom_call.1} parent=1 // pred_region
      %84 = dma.done [#allocation7], 512
    $region49: #{tpu_custom_call.1} parent=1 // pred_fallthru
      _
    // Predicated region
    $region50: #{tpu_custom_call.1} parent=1 // pred_check
      _
    $region51: #{tpu_custom_call.1} parent=1 // pred_check_branch
      %86 = sbr.rel (0) target = $region53
    $region52: #{tpu_custom_call.1} parent=1 // pred_region
      %87 = dma.done [#allocation10], 512
    $region53: #{tpu_custom_call.1} parent=1 // pred_fallthru
      _
    %v88 = vld [vmem:[#allocation3] sm:$0xf]
    %v89 = vld [vmem:[#allocation6] sm:$0xff]
    %v90 = vld [vmem:[#allocation6 + $0x8] sm:$0xff]
    %v91 = vld [vmem:[%s2] sm:$0x1]
    %v93 = vlaneseq
    %v94 = vshrl.u32 %v93, 7
    %v95 = vsub.s32 0, %v94
    %v96 = vrot.slane %v91, %v95
    %vm98 = vcmask 130048
    %v100 = vsel %vm98, %v88, 0
    %102 = vmatprep.subr.mxu0 0.0
    %103 = vmatpush1.msra.mxu0 %v89
    %104 = vmatprep.subr.mxu0 0.0
    %105 = vmatpush1.msra.mxu0 %v90
    %106 = vmatprep.subr.mxu0 0.0
    %107 = vmatpush1.msra.mxu0 0.0
    %108 = vmatprep.subr.mxu0 0.0
    %109 = vmatpush1.msra.mxu0 0.0
    %110 = vmatprep.subr.mxu0 0.0
    %111 = vmatpush1.msra.mxu0 0.0
    %112 = vmatprep.subr.mxu0 0.0
    %113 = vmatpush1.msra.mxu0 0.0
    %114 = vmatprep.subr.mxu0 0.0
    %115 = vmatpush1.msra.mxu0 0.0
    %116 = vmatprep.subr.mxu0 0.0
    %117 = vmatpush1.msra.mxu0 0.0
    %118 = vmatprep.subr.mxu0 0.0
    %119 = vmatpush1.msra.mxu0 0.0
    %120 = vmatprep.subr.mxu0 0.0
    %121 = vmatpush1.msra.mxu0 0.0
    %122 = vmatprep.subr.mxu0 0.0
    %123 = vmatpush1.msra.mxu0 0.0
    %124 = vmatprep.subr.mxu0 0.0
    %125 = vmatpush1.msra.mxu0 0.0
    %126 = vmatprep.subr.mxu0 0.0
    %127 = vmatpush1.msra.mxu0 0.0
    %128 = vmatprep.subr.mxu0 0.0
    %129 = vmatpush1.msra.mxu0 0.0
    %130 = vmatprep.subr.mxu0 0.0
    %131 = vmatpush1.msra.mxu0 0.0
    %132 = vmatprep.subr.mxu0 0.0
    %133 = vmatpush1.msra.mxu0 0.0
    %134 = vmatprep.subr.mxu0 0.0
    %135 = vmatpush1.msra.mxu0 0.0
    %136 = vmatprep.subr.mxu0 0.0
    %137 = vmatpush1.msra.mxu0 0.0
    %138 = vmatprep.subr.mxu0 0.0
    %139 = vmatpush1.msra.mxu0 0.0
    %140 = vmatprep.subr.mxu0 0.0
    %141 = vmatpush1.msra.mxu0 0.0
    %142 = vmatprep.subr.mxu0 0.0
    %143 = vmatpush1.msra.mxu0 0.0
    %144 = vmatprep.subr.mxu0 0.0
    %145 = vmatpush1.msra.mxu0 0.0
    %146 = vmatprep.subr.mxu0 0.0
    %147 = vmatpush1.msra.mxu0 0.0
    %148 = vmatprep.subr.mxu0 0.0
    %149 = vmatpush1.msra.mxu0 0.0
    %150 = vmatprep.subr.mxu0 0.0
    %151 = vmatpush1.msra.mxu0 0.0
    %152 = vmatprep.subr.mxu0 0.0
    %153 = vmatpush1.msra.mxu0 0.0
    %154 = vmatprep.subr.mxu0 0.0
    %155 = vmatpush1.msra.mxu0 0.0
    %156 = vmatprep.subr.mxu0 0.0
    %157 = vmatpush1.msra.mxu0 0.0
    %158 = vmatprep.subr.mxu0 0.0
    %159 = vmatpush1.msra.mxu0 0.0
    %160 = vmatprep.subr.mxu0 0.0
    %161 = vmatpush1.msra.mxu0 0.0
    %162 = vmatprep.subr.mxu0 0.0
    %163 = vmatpush1.msra.mxu0 0.0
    %164 = vmatprep.subr.mxu0 0.0
    %165 = vmatpush1.msra.mxu0 0.0
    %166 = vmatprep.mubr.f32.mxu0 0.0
    %167 = vmatmul.mubr.f32.gmra.mrb[0].mxu0 %v100
    %v168 = vpop.f32.mrb[0].mxu0
    %v169 = vadd.f32 %v96, %v168
    %v170 = vpop.f32.mrb[0].mxu0
    %171 = vdwg.mxu0
    %v172 = vmax.f32 %v169, 0.0
    %v173 = vld [vmem:[#allocation8] sm:$0xff]
    %v174 = vld [vmem:[#allocation8 + $0x8] sm:$0xff]
    %v175 = vld [vmem:[#allocation8 + $0x10] sm:$0xff]
    %v176 = vld [vmem:[#allocation8 + $0x18] sm:$0xff]
    %v177 = vld [vmem:[%s4] sm:$0x1]
    %v179 = vlaneseq
    %v180 = vshrl.u32 %v179, 7
    %v181 = vsub.s32 0, %v180
    %v182 = vrot.slane %v177, %v181
    %vm184 = vcmask 261120
    %v186 = vsel %vm184, %v172, 0
    %188 = vmatprep.subr.mxu0 0.0
    %189 = vmatpush1.msra.mxu0 %v173
    %190 = vmatprep.subr.mxu0 0.0
    %191 = vmatpush1.msra.mxu0 %v174
    %192 = vmatprep.subr.mxu0 0.0
    %193 = vmatpush1.msra.mxu0 %v175
    %194 = vmatprep.subr.mxu0 0.0
    %195 = vmatpush1.msra.mxu0 %v176
    %196 = vmatprep.subr.mxu0 0.0
    %197 = vmatpush1.msra.mxu0 0.0
    %198 = vmatprep.subr.mxu0 0.0
    %199 = vmatpush1.msra.mxu0 0.0
    %200 = vmatprep.subr.mxu0 0.0
    %201 = vmatpush1.msra.mxu0 0.0
    %202 = vmatprep.subr.mxu0 0.0
    %203 = vmatpush1.msra.mxu0 0.0
    %204 = vmatprep.subr.mxu0 0.0
    %205 = vmatpush1.msra.mxu0 0.0
    %206 = vmatprep.subr.mxu0 0.0
    %207 = vmatpush1.msra.mxu0 0.0
    %208 = vmatprep.subr.mxu0 0.0
    %209 = vmatpush1.msra.mxu0 0.0
    %210 = vmatprep.subr.mxu0 0.0
    %211 = vmatpush1.msra.mxu0 0.0
    %212 = vmatprep.subr.mxu0 0.0
    %213 = vmatpush1.msra.mxu0 0.0
    %214 = vmatprep.subr.mxu0 0.0
    %215 = vmatpush1.msra.mxu0 0.0
    %216 = vmatprep.subr.mxu0 0.0
    %217 = vmatpush1.msra.mxu0 0.0
    %218 = vmatprep.subr.mxu0 0.0
    %219 = vmatpush1.msra.mxu0 0.0
    %220 = vmatprep.subr.mxu0 0.0
    %221 = vmatpush1.msra.mxu0 0.0
    %222 = vmatprep.subr.mxu0 0.0
    %223 = vmatpush1.msra.mxu0 0.0
    %224 = vmatprep.subr.mxu0 0.0
    %225 = vmatpush1.msra.mxu0 0.0
    %226 = vmatprep.subr.mxu0 0.0
    %227 = vmatpush1.msra.mxu0 0.0
    %228 = vmatprep.subr.mxu0 0.0
    %229 = vmatpush1.msra.mxu0 0.0
    %230 = vmatprep.subr.mxu0 0.0
    %231 = vmatpush1.msra.mxu0 0.0
    %232 = vmatprep.subr.mxu0 0.0
    %233 = vmatpush1.msra.mxu0 0.0
    %234 = vmatprep.subr.mxu0 0.0
    %235 = vmatpush1.msra.mxu0 0.0
    %236 = vmatprep.subr.mxu0 0.0
    %237 = vmatpush1.msra.mxu0 0.0
    %238 = vmatprep.subr.mxu0 0.0
    %239 = vmatpush1.msra.mxu0 0.0
    %240 = vmatprep.subr.mxu0 0.0
    %241 = vmatpush1.msra.mxu0 0.0
    %242 = vmatprep.subr.mxu0 0.0
    %243 = vmatpush1.msra.mxu0 0.0
    %244 = vmatprep.subr.mxu0 0.0
    %245 = vmatpush1.msra.mxu0 0.0
    %246 = vmatprep.subr.mxu0 0.0
    %247 = vmatpush1.msra.mxu0 0.0
    %248 = vmatprep.subr.mxu0 0.0
    %249 = vmatpush1.msra.mxu0 0.0
    %250 = vmatprep.subr.mxu0 0.0
    %251 = vmatpush1.msra.mxu0 0.0
    %252 = vmatprep.mubr.f32.mxu0 0.0
    %253 = vmatmul.mubr.f32.gmra.mrb[0].mxu0 %v186
    %v254 = vpop.f32.mrb[0].mxu0
    %v255 = vadd.f32 %v182, %v254
    %v256 = vpop.f32.mrb[0].mxu0
    %257 = vdwg.mxu0
    %v258 = vmax.f32 %v255, 0.0
    %v259 = vadd.f32 %v258, %v172
    %v260 = vld [vmem:[#allocation9] sm:$0xff]
    %v261 = vld [vmem:[#allocation9 + $0x8] sm:$0xff]
    %v262 = vld [vmem:[#allocation9 + $0x10] sm:$0xff]
    %v263 = vld [vmem:[#allocation9 + $0x18] sm:$0xff]
    %v264 = vld [vmem:[%s6] sm:$0x1]
    %v266 = vlaneseq
    %v267 = vshrl.u32 %v266, 7
    %v268 = vsub.s32 0, %v267
    %v269 = vrot.slane %v264, %v268
    %v272 = vsel %vm184, %v259, 0
    %274 = vmatprep.subr.mxu0 0.0
    %275 = vmatpush1.msra.mxu0 %v260
    %276 = vmatprep.subr.mxu0 0.0
    %277 = vmatpush1.msra.mxu0 %v261
    %278 = vmatprep.subr.mxu0 0.0
    %279 = vmatpush1.msra.mxu0 %v262
    %280 = vmatprep.subr.mxu0 0.0
    %281 = vmatpush1.msra.mxu0 %v263
    %282 = vmatprep.subr.mxu0 0.0
    %283 = vmatpush1.msra.mxu0 0.0
    %284 = vmatprep.subr.mxu0 0.0
    %285 = vmatpush1.msra.mxu0 0.0
    %286 = vmatprep.subr.mxu0 0.0
    %287 = vmatpush1.msra.mxu0 0.0
    %288 = vmatprep.subr.mxu0 0.0
    %289 = vmatpush1.msra.mxu0 0.0
    %290 = vmatprep.subr.mxu0 0.0
    %291 = vmatpush1.msra.mxu0 0.0
    %292 = vmatprep.subr.mxu0 0.0
    %293 = vmatpush1.msra.mxu0 0.0
    %294 = vmatprep.subr.mxu0 0.0
    %295 = vmatpush1.msra.mxu0 0.0
    %296 = vmatprep.subr.mxu0 0.0
    %297 = vmatpush1.msra.mxu0 0.0
    %298 = vmatprep.subr.mxu0 0.0
    %299 = vmatpush1.msra.mxu0 0.0
    %300 = vmatprep.subr.mxu0 0.0
    %301 = vmatpush1.msra.mxu0 0.0
    %302 = vmatprep.subr.mxu0 0.0
    %303 = vmatpush1.msra.mxu0 0.0
    %304 = vmatprep.subr.mxu0 0.0
    %305 = vmatpush1.msra.mxu0 0.0
    %306 = vmatprep.subr.mxu0 0.0
    %307 = vmatpush1.msra.mxu0 0.0
    %308 = vmatprep.subr.mxu0 0.0
    %309 = vmatpush1.msra.mxu0 0.0
    %310 = vmatprep.subr.mxu0 0.0
    %311 = vmatpush1.msra.mxu0 0.0
    %312 = vmatprep.subr.mxu0 0.0
    %313 = vmatpush1.msra.mxu0 0.0
    %314 = vmatprep.subr.mxu0 0.0
    %315 = vmatpush1.msra.mxu0 0.0
    %316 = vmatprep.subr.mxu0 0.0
    %317 = vmatpush1.msra.mxu0 0.0
    %318 = vmatprep.subr.mxu0 0.0
    %319 = vmatpush1.msra.mxu0 0.0
    %320 = vmatprep.subr.mxu0 0.0
    %321 = vmatpush1.msra.mxu0 0.0
    %322 = vmatprep.subr.mxu0 0.0
    %323 = vmatpush1.msra.mxu0 0.0
    %324 = vmatprep.subr.mxu0 0.0
    %325 = vmatpush1.msra.mxu0 0.0
    %326 = vmatprep.subr.mxu0 0.0
    %327 = vmatpush1.msra.mxu0 0.0
    %328 = vmatprep.subr.mxu0 0.0
    %329 = vmatpush1.msra.mxu0 0.0
    %330 = vmatprep.subr.mxu0 0.0
    %331 = vmatpush1.msra.mxu0 0.0
    %332 = vmatprep.subr.mxu0 0.0
    %333 = vmatpush1.msra.mxu0 0.0
    %334 = vmatprep.subr.mxu0 0.0
    %335 = vmatpush1.msra.mxu0 0.0
    %336 = vmatprep.subr.mxu0 0.0
    %337 = vmatpush1.msra.mxu0 0.0
    %338 = vmatprep.mubr.f32.mxu0 0.0
    %339 = vmatmul.mubr.f32.gmra.mrb[0].mxu0 %v272
    %v340 = vpop.f32.mrb[0].mxu0
    %v341 = vadd.f32 %v269, %v340
    %v342 = vpop.f32.mrb[0].mxu0
    %343 = vdwg.mxu0
    %v344 = vlaneseq
    %v345 = vand.u32 %v344, 127
    %vm346 = vcmp.lt.s32.totalorder %v345, 64
    %v347 = vmax.f32 %v341, 0.0
    %v348 = vsel %vm346, %v347, %v341
    %v349 = vld [vmem:[%s7] sm:$0x1]
    %v350 = vld [vmem:[#allocation2] sm:$0x1]
    %352 = vset.pattern.permute.xlu0 0
    %353 = vperm.xlu0 %352, %v350
    %v354 = vpop.permute.xlu0 %353
    %v356 = vlaneseq
    %v357 = vshrl.u32 %v356, 7
    %v358 = vsub.s32 0, %v357
    %v359 = vrot.slane %v354, %v358
    %360 = vmatprep.subr.mxu0 0.0
    %361 = vmatpush1.xpose.msra.mxu0 %v348
    %362 = vmatprep.subr.mxu0 0.0
    %363 = vmatpush1.xpose.msra.mxu0 0.0
    %364 = vmatprep.subr.mxu0 0.0
    %365 = vmatpush1.xpose.msra.mxu0 0.0
    %366 = vmatprep.subr.mxu0 0.0
    %367 = vmatpush1.xpose.msra.mxu0 0.0
    %368 = vmatprep.subr.mxu0 0.0
    %369 = vmatpush1.xpose.msra.mxu0 0.0
    %370 = vmatprep.subr.mxu0 0.0
    %371 = vmatpush1.xpose.msra.mxu0 0.0
    %372 = vmatprep.subr.mxu0 0.0
    %373 = vmatpush1.xpose.msra.mxu0 0.0
    %374 = vmatprep.subr.mxu0 0.0
    %375 = vmatpush1.xpose.msra.mxu0 0.0
    %376 = vmatprep.subr.mxu0 0.0
    %377 = vmatpush1.xpose.msra.mxu0 0.0
    %378 = vmatprep.subr.mxu0 0.0
    %379 = vmatpush1.xpose.msra.mxu0 0.0
    %380 = vmatprep.subr.mxu0 0.0
    %381 = vmatpush1.xpose.msra.mxu0 0.0
    %382 = vmatprep.subr.mxu0 0.0
    %383 = vmatpush1.xpose.msra.mxu0 0.0
    %384 = vmatprep.subr.mxu0 0.0
    %385 = vmatpush1.xpose.msra.mxu0 0.0
    %386 = vmatprep.subr.mxu0 0.0
    %387 = vmatpush1.xpose.msra.mxu0 0.0
    %388 = vmatprep.subr.mxu0 0.0
    %389 = vmatpush1.xpose.msra.mxu0 0.0
    %390 = vmatprep.subr.mxu0 0.0
    %391 = vmatpush1.xpose.msra.mxu0 0.0
    %392 = vmatprep.subr.mxu0 0.0
    %393 = vmatpush1.xpose.msra.mxu0 0.0
    %394 = vmatprep.subr.mxu0 0.0
    %395 = vmatpush1.xpose.msra.mxu0 0.0
    %396 = vmatprep.subr.mxu0 0.0
    %397 = vmatpush1.xpose.msra.mxu0 0.0
    %398 = vmatprep.subr.mxu0 0.0
    %399 = vmatpush1.xpose.msra.mxu0 0.0
    %400 = vmatprep.subr.mxu0 0.0
    %401 = vmatpush1.xpose.msra.mxu0 0.0
    %402 = vmatprep.subr.mxu0 0.0
    %403 = vmatpush1.xpose.msra.mxu0 0.0
    %404 = vmatprep.subr.mxu0 0.0
    %405 = vmatpush1.xpose.msra.mxu0 0.0
    %406 = vmatprep.subr.mxu0 0.0
    %407 = vmatpush1.xpose.msra.mxu0 0.0
    %408 = vmatprep.subr.mxu0 0.0
    %409 = vmatpush1.xpose.msra.mxu0 0.0
    %410 = vmatprep.subr.mxu0 0.0
    %411 = vmatpush1.xpose.msra.mxu0 0.0
    %412 = vmatprep.subr.mxu0 0.0
    %413 = vmatpush1.xpose.msra.mxu0 0.0
    %414 = vmatprep.subr.mxu0 0.0
    %415 = vmatpush1.xpose.msra.mxu0 0.0
    %416 = vmatprep.subr.mxu0 0.0
    %417 = vmatpush1.xpose.msra.mxu0 0.0
    %418 = vmatprep.subr.mxu0 0.0
    %419 = vmatpush1.xpose.msra.mxu0 0.0
    %420 = vmatprep.subr.mxu0 0.0
    %421 = vmatpush1.xpose.msra.mxu0 0.0
    %422 = vmatprep.subr.mxu0 0.0
    %423 = vmatpush1.xpose.msra.mxu0 0.0
    %424 = vmatprep.mubr.f32.mxu0 0.0
    %425 = vmatmul.mubr.f32.gmra.mrb[0].mxu0 %v349
    %v426 = vpop.f32.mrb[0].mxu0
    %v427 = vadd.f32 %v359, %v426
    %v428 = vpop.f32.mrb[0].mxu0
    %429 = vdwg.mxu0
    %vm430 = vcmask 24576
    %431 = vst.msk [vmem:[#allocation11] sm:$0x1] %vm430, %v427
    // Predicated region
    $region54: #{tpu_custom_call.1} parent=1 // pred_check
      _
    $region55: #{tpu_custom_call.1} parent=1 // pred_check_branch
      %433 = sbr.rel (0) target = $region57
    $region56: #{tpu_custom_call.1} parent=1 // pred_region
      %s435 = ssub.s32 16, 16
      %436 = vsyncadd [#allocation5], %s435
      %s438 = sshll.u32 [#allocation11], 4
      %s439 = int_to_ptr.vmem [resolvable:$true] %s438
      %441 = dma.vmem_to_hbm [thread:$0]  %s439, 16, %s9, [#allocation5]
    $region57: #{tpu_custom_call.1} parent=1 // pred_fallthru
      _
    // Predicated region
    $region58: #{tpu_custom_call.1} parent=1 // pred_check
      _
    $region59: #{tpu_custom_call.1} parent=1 // pred_check_branch
      %443 = sbr.rel (0) target = $region61
    $region60: #{tpu_custom_call.1} parent=1 // pred_region
      %444 = dma.done [#allocation5], 16
    $region61: #{tpu_custom_call.1} parent=1 // pred_fallthru
      _
    %445 = vsyncpa [#allocation4], 1
    %446 = vsyncpa [#allocation7], 1
    %447 = vsyncpa [#allocation10], 1
    %448 = vsyncpa [#allocation5], 1

</llo_original>
